<compile_context>
chip_gen: v6e
topology: v6e:2x2x1
jax: 0.10.0
libtpu: 0.0.40
codegen_flags: <defaults>
</compile_context>

<pallas_src>
import functools

import jax
import jax.numpy as jnp
import numpy as np
from jax.experimental import pallas as pl
from jax.experimental.pallas import tpu as pltpu


_ACC_ROWS = 16   # rows 0..11 used: [ce_num, ce_den, sx_v, sx_a, sy_v, sy_a, sxx_v, sxx_a, syy_v, syy_a, sxy_v, sxy_a]
_NCORES = 2      # leading "parallel" grid axis (v7x megacore split; plain serial loop on v5e/v6e)
_TB_CAP = 32768  # batch-tile cap (lanes): (16, 32768) f32 block = 2 MiB


def _round_up(x, m):
    return ((x + m - 1) // m) * m


def _multitask_partials_kernel(slab_ref, w_ref, out_ref, acc_ref, *,
                               num_classes, row_labels, row_yv):
    C = num_classes
    i = pl.program_id(1)

    @pl.when(i == 0)
    def _init():
        acc_ref[...] = jnp.zeros_like(acc_ref)

    # -------- weighted cross-entropy (classes on sublanes, batch on lanes) --------
    logits = slab_ref[:C, :]                                        # (C, TB) f32
    m = jnp.max(logits, axis=0, keepdims=True)                      # (1, TB)
    z = logits - m
    lse = jnp.log(jnp.sum(jnp.exp(z), axis=0, keepdims=True))       # (1, TB)
    labels = slab_ref[row_labels:row_labels + 1, :]                 # (1, TB) float labels; padding = -1
    cls = jax.lax.broadcasted_iota(jnp.int32, z.shape, 0).astype(jnp.float32)
    onehot = (cls == labels).astype(jnp.float32)                    # (C, TB); all-zero column for padding
    picked_z = jnp.sum(onehot * z, axis=0, keepdims=True)           # (1, TB)
    w_row = jnp.sum(onehot * w_ref[...], axis=0, keepdims=True)     # (1, TB) = w_{y_i}, 0 on padding
    ce_num = jnp.sum(w_row * (lse - picked_z), axis=1, keepdims=True)   # (1, 1)
    ce_den = jnp.sum(w_row, axis=1, keepdims=True)                      # (1, 1)

    # -------- CCC raw moments for the (valence, arousal) heads (padding columns are zero) --------
    x = slab_ref[C:C + 2, :]                  # (2, TB) predictions [valence, arousal]
    y = slab_ref[row_yv:row_yv + 2, :]        # (2, TB) targets, sublane-aligned with x
    sx = jnp.sum(x, axis=1, keepdims=True)
    sy = jnp.sum(y, axis=1, keepdims=True)
    sxx = jnp.sum(x * x, axis=1, keepdims=True)
    syy = jnp.sum(y * y, axis=1, keepdims=True)
    sxy = jnp.sum(x * y, axis=1, keepdims=True)

    acc_ref[0:1, :] += ce_num
    acc_ref[1:2, :] += ce_den
    acc_ref[2:4, :] += sx
    acc_ref[4:6, :] += sy
    acc_ref[6:8, :] += sxx
    acc_ref[8:10, :] += syy
    acc_ref[10:12, :] += sxy

    @pl.when(i == pl.num_programs(1) - 1)
    def _emit():
        out_ref[...] = acc_ref[...].reshape(1, _ACC_ROWS, 1)


def multitask_loss(preds, emotion_labels, valence_t, arousal_t, class_weights, num_classes):
    """Pallas-backed equivalent of MultiTaskLossWrapper.forward."""
    B, F = preds.shape
    C = num_classes
    assert F == C + 2

    # ---- row layout of the packed (R, Bp) f32 slab ----
    rows_preds = C + 2
    aux_base = _round_up(rows_preds, 8)
    row_labels = aux_base
    off = C % 8
    row_yv = aux_base + off if 1 <= off <= 6 else aux_base + 1   # align targets with pred heads
    row_ya = row_yv + 1
    R = _round_up(row_ya + 1, 8)

    # ---- batch tiling: 2-way (megacore) split x streaming inner blocks ----
    nblk_inner = max(1, pl.cdiv(B, _NCORES * _TB_CAP))
    TB = min(_TB_CAP, _round_up(pl.cdiv(B, _NCORES * nblk_inner), 128))
    Bp = _NCORES * nblk_inner * TB

    # ---- build the single packed slab (padding: zero logits/targets, label = -1) ----
    slab = jnp.zeros((R, Bp), jnp.float32)
    slab = slab.at[:rows_preds, :B].set(preds.T.astype(jnp.float32))
    slab = slab.at[row_labels, :].set(-1.0)
    slab = slab.at[row_labels, :B].set(emotion_labels.astype(jnp.float32))
    slab = slab.at[row_yv, :B].set(valence_t.astype(jnp.float32))
    slab = slab.at[row_ya, :B].set(arousal_t.astype(jnp.float32))
    w_col = class_weights.astype(jnp.float32).reshape(C, 1)

    kernel = functools.partial(_multitask_partials_kernel, num_classes=C,
                               row_labels=row_labels, row_yv=row_yv)

    cost = pl.CostEstimate(
        flops=int(B) * (10 * C + 40),
        transcendentals=int(B) * (C + 1),
        bytes_accessed=int(R * Bp * 4 + C * 4 + _NCORES * _ACC_ROWS * 4),
    )

    partials = pl.pallas_call(
        kernel,
        out_shape=jax.ShapeDtypeStruct((_NCORES, _ACC_ROWS, 1), jnp.float32),
        grid_spec=pltpu.PrefetchScalarGridSpec(
            num_scalar_prefetch=0,
            grid=(_NCORES, nblk_inner),
            in_specs=[
                pl.BlockSpec((R, TB), lambda c, i: (0, c * nblk_inner + i)),   # packed slab
                pl.BlockSpec((C, 1), lambda c, i: (0, 0)),                     # class weights (resident)
            ],
            out_specs=pl.BlockSpec((1, _ACC_ROWS, 1), lambda c, i: (c, 0, 0)),  # per-core partials
            scratch_shapes=[pltpu.VMEM((_ACC_ROWS, 1), jnp.float32)],
        ),
        compiler_params=pltpu.CompilerParams(
            dimension_semantics=("parallel", "arbitrary"),
        ),
        cost_estimate=cost,
    )(slab, w_col)

    # ---- tiny scalar finalize in plain JAX: combine per-core partials ----
    tot = jnp.sum(partials[:, :, 0], axis=0)          # (ACC_ROWS,)
    n = jnp.float32(B)
    ce = tot[0] / tot[1]

    def ccc_loss(sx, sy, sxx, syy, sxy):
        mx, my = sx / n, sy / n
        vx = sxx / n - mx * mx
        vy = syy / n - my * my
        cov = sxy / n - mx * my
        return 1.0 - (2.0 * cov) / (vx + vy + (mx - my) * (mx - my) + 1e-8)

    loss_valence = ccc_loss(tot[2], tot[4], tot[6], tot[8], tot[10])
    loss_arousal = ccc_loss(tot[3], tot[5], tot[7], tot[9], tot[11])
    return ce + (loss_valence + loss_arousal) * 1.0


def _reference_loss(preds, emotion_labels, valence_t, arousal_t, class_weights, num_classes):
    """Pure-JAX reference mirroring the PyTorch module."""
    logits = preds.astype(jnp.float32)[:, :num_classes]
    logp = jax.nn.log_softmax(logits, axis=-1)
    picked_logp = jnp.take_along_axis(logp, emotion_labels[:, None], axis=1)[:, 0]
    picked_w = class_weights[emotion_labels]
    ce = jnp.sum(-picked_logp * picked_w) / jnp.sum(picked_w)

    def ccc_loss(x, y):
        x = x.astype(jnp.float32)
        y = y.astype(jnp.float32)
        mx, my = jnp.mean(x), jnp.mean(y)
        vx, vy = jnp.mean((x - mx) ** 2), jnp.mean((y - my) ** 2)
        cov = jnp.mean((x - mx) * (y - my))
        return 1.0 - (2.0 * cov) / (vx + vy + (mx - my) ** 2 + 1e-8)

    return (ce
            + ccc_loss(preds[:, num_classes], valence_t)
            + ccc_loss(preds[:, num_classes + 1], arousal_t))


def _make_inputs(key, batch, num_classes):
    k_preds, k_lab, k_val, k_aro = jax.random.split(key, 4)
    preds = jax.random.normal(k_preds, (batch, num_classes + 2), dtype=jnp.float32)
    labels = jax.random.randint(k_lab, (batch,), 0, num_classes, dtype=jnp.int32)
    val = jax.random.uniform(k_val, (batch,), dtype=jnp.float32, minval=-1.0, maxval=1.0)
    aro = jax.random.uniform(k_aro, (batch,), dtype=jnp.float32, minval=-1.0, maxval=1.0)
    return preds, labels, val, aro


if __name__ == "__main__":
    NUM_CLASSES = 6
    # Deterministic class weights (stand-in for the class_weights dict in __init__).
    class_weights = 0.5 + 0.1 * jnp.arange(NUM_CLASSES, dtype=jnp.float32)

    loss_fn = jax.jit(multitask_loss, static_argnums=(5,))

    key = jax.random.PRNGKey(0)
    k_small, k_big = jax.random.split(key)

    # Small smoke test (B=8): single inner block, exercises zero/-1 padding of the tail and
    # the all-padding second core slice.
    preds, labels, val, aro = _make_inputs(k_small, 8, NUM_CLASSES)
    loss = jax.block_until_ready(loss_fn(preds, labels, val, aro, class_weights, NUM_CLASSES))
    ref = _reference_loss(preds, labels, val, aro, class_weights, NUM_CLASSES)
    np.testing.assert_allclose(np.asarray(loss), np.asarray(ref), rtol=1e-5, atol=1e-5)

    # Multi-block test: exercises the streaming accumulator across inner grid steps and the
    # per-core partial combine (grid = (2, 2)).
    B2 = 70_000
    preds2, labels2, val2, aro2 = _make_inputs(k_big, B2, NUM_CLASSES)
    loss2 = jax.block_until_ready(loss_fn(preds2, labels2, val2, aro2, class_weights, NUM_CLASSES))
    ref2 = _reference_loss(preds2, labels2, val2, aro2, class_weights, NUM_CLASSES)
    np.testing.assert_allclose(np.asarray(loss2), np.asarray(ref2), rtol=1e-4, atol=1e-4)

    print("KERNEL_OK")
</pallas_src>

<mosaic_0001>
module attributes {stable_mosaic.version = 11 : i64} {
  func.func @_multitask_partials_kernel(%arg0: i32, %arg1: i32, %arg2: memref<16x128xf32, #tpu.memory_space<vmem>>, %arg3: memref<6x1xf32, #tpu.memory_space<vmem>>, %arg4: memref<1x16x1xf32, #tpu.memory_space<vmem>>, %arg5: memref<16x1xf32, #tpu.memory_space<vmem>>) attributes {dimension_semantics = [#tpu.dimension_semantics<parallel>, #tpu.dimension_semantics<arbitrary>], iteration_bounds = array<i64: 2, 1>, scalar_prefetch = 0 : i64, scratch_operands = 1 : i64, tpu.core_type = #tpu.core_type<tc>, window_params = [{transform_indices = @transform_0, window_bounds = array<i64: 16, 128>}, {pipeline_mode = #tpu.pipeline_mode<synchronous>, transform_indices = @transform_1, window_bounds = array<i64: 6, 1>}, {transform_indices = @transform_2, window_bounds = array<i64: 1, 16, 1>}]} {
    %c0_i32 = arith.constant 0 : i32
    %0 = arith.cmpi eq, %arg1, %c0_i32 : i32
    %1 = arith.extui %0 : i1 to i32
    %c0_i32_0 = arith.constant 0 : i32
    %2 = arith.cmpi ne, %1, %c0_i32_0 : i32
    scf.if %2 {
      %cst_43 = arith.constant 0.000000e+00 : f32
      %72 = vector.broadcast %cst_43 : f32 to vector<16x1xf32>
      %c0_44 = arith.constant 0 : index
      %c0_45 = arith.constant 0 : index
      %73 = vector.load %arg5[%c0_44, %c0_45] : memref<16x1xf32, #tpu.memory_space<vmem>>, vector<16x1xf32>
      tpu.vector_store %arg5[%c0_44, %c0_45], %72 {strides = array<i32>} : memref<16x1xf32, #tpu.memory_space<vmem>>, vector<16x1xf32>,
    } else {
    }
    %c0 = arith.constant 0 : index
    %c0_1 = arith.constant 0 : index
    %3 = vector.load %arg2[%c0, %c0_1] : memref<16x128xf32, #tpu.memory_space<vmem>>, vector<6x128xf32>
    %cst = arith.constant dense<0xFF800000> : vector<128xf32>
    %4 = vector.multi_reduction <maximumf>, %3, %cst [0] : vector<6x128xf32> to vector<128xf32>
    %5 = vector.shape_cast %4 : vector<128xf32> to vector<1x128xf32>
    %6 = vector.broadcast %5 : vector<1x128xf32> to vector<6x128xf32>
    %7 = arith.subf %3, %6 : vector<6x128xf32>
    %8 = math.exp %7 : vector<6x128xf32>
    %cst_2 = arith.constant dense<0.000000e+00> : vector<128xf32>
    %9 = vector.multi_reduction <add>, %8, %cst_2 [0] : vector<6x128xf32> to vector<128xf32>
    %10 = vector.shape_cast %9 : vector<128xf32> to vector<1x128xf32>
    %11 = math.log %10 : vector<1x128xf32>
    %c8 = arith.constant 8 : index
    %c0_3 = arith.constant 0 : index
    %12 = vector.load %arg2[%c8, %c0_3] : memref<16x128xf32, #tpu.memory_space<vmem>>, vector<1x128xf32>
    %13 = tpu.iota {dimensions = array<i32: 0>} : vector<6x128xi32>
    %14 = arith.sitofp %13 : vector<6x128xi32> to vector<6x128xf32>
    %15 = vector.broadcast %12 : vector<1x128xf32> to vector<6x128xf32>
    %16 = arith.cmpf oeq, %14, %15 : vector<6x128xf32>
    %17 = arith.extui %16 : vector<6x128xi1> to vector<6x128xi32>
    %18 = arith.sitofp %17 : vector<6x128xi32> to vector<6x128xf32>
    %19 = arith.mulf %18, %7 : vector<6x128xf32>
    %cst_4 = arith.constant dense<0.000000e+00> : vector<128xf32>
    %20 = vector.multi_reduction <add>, %19, %cst_4 [0] : vector<6x128xf32> to vector<128xf32>
    %21 = vector.shape_cast %20 : vector<128xf32> to vector<1x128xf32>
    %c0_5 = arith.constant 0 : index
    %c0_6 = arith.constant 0 : index
    %22 = vector.load %arg3[%c0_5, %c0_6] : memref<6x1xf32, #tpu.memory_space<vmem>>, vector<6x1xf32>
    %23 = vector.broadcast %22 : vector<6x1xf32> to vector<6x128xf32>
    %24 = arith.mulf %18, %23 : vector<6x128xf32>
    %cst_7 = arith.constant dense<0.000000e+00> : vector<128xf32>
    %25 = vector.multi_reduction <add>, %24, %cst_7 [0] : vector<6x128xf32> to vector<128xf32>
    %26 = vector.shape_cast %25 : vector<128xf32> to vector<1x128xf32>
    %27 = arith.subf %11, %21 : vector<1x128xf32>
    %28 = arith.mulf %26, %27 : vector<1x128xf32>
    %cst_8 = arith.constant dense<0.000000e+00> : vector<1xf32>
    %29 = vector.multi_reduction <add>, %28, %cst_8 [1] : vector<1x128xf32> to vector<1xf32>
    %30 = vector.shape_cast %29 : vector<1xf32> to vector<1x1xf32>
    %cst_9 = arith.constant dense<0.000000e+00> : vector<1xf32>
    %31 = vector.multi_reduction <add>, %26, %cst_9 [1] : vector<1x128xf32> to vector<1xf32>
    %32 = vector.shape_cast %31 : vector<1xf32> to vector<1x1xf32>
    %c6 = arith.constant 6 : index
    %c0_10 = arith.constant 0 : index
    %33 = vector.load %arg2[%c6, %c0_10] : memref<16x128xf32, #tpu.memory_space<vmem>>, vector<2x128xf32>
    %c14 = arith.constant 14 : index
    %c0_11 = arith.constant 0 : index
    %34 = vector.load %arg2[%c14, %c0_11] : memref<16x128xf32, #tpu.memory_space<vmem>>, vector<2x128xf32>
    %cst_12 = arith.constant dense<0.000000e+00> : vector<2xf32>
    %35 = vector.multi_reduction <add>, %33, %cst_12 [1] : vector<2x128xf32> to vector<2xf32>
    %36 = vector.shape_cast %35 : vector<2xf32> to vector<2x1xf32>
    %cst_13 = arith.constant dense<0.000000e+00> : vector<2xf32>
    %37 = vector.multi_reduction <add>, %34, %cst_13 [1] : vector<2x128xf32> to vector<2xf32>
    %38 = vector.shape_cast %37 : vector<2xf32> to vector<2x1xf32>
    %39 = arith.mulf %33, %33 : vector<2x128xf32>
    %cst_14 = arith.constant dense<0.000000e+00> : vector<2xf32>
    %40 = vector.multi_reduction <add>, %39, %cst_14 [1] : vector<2x128xf32> to vector<2xf32>
    %41 = vector.shape_cast %40 : vector<2xf32> to vector<2x1xf32>
    %42 = arith.mulf %34, %34 : vector<2x128xf32>
    %cst_15 = arith.constant dense<0.000000e+00> : vector<2xf32>
    %43 = vector.multi_reduction <add>, %42, %cst_15 [1] : vector<2x128xf32> to vector<2xf32>
    %44 = vector.shape_cast %43 : vector<2xf32> to vector<2x1xf32>
    %45 = arith.mulf %33, %34 : vector<2x128xf32>
    %cst_16 = arith.constant dense<0.000000e+00> : vector<2xf32>
    %46 = vector.multi_reduction <add>, %45, %cst_16 [1] : vector<2x128xf32> to vector<2xf32>
    %47 = vector.shape_cast %46 : vector<2xf32> to vector<2x1xf32>
    %c0_17 = arith.constant 0 : index
    %c0_18 = arith.constant 0 : index
    %48 = vector.load %arg5[%c0_17, %c0_18] : memref<16x1xf32, #tpu.memory_space<vmem>>, vector<1x1xf32>
    %49 = arith.addf %48, %30 : vector<1x1xf32>
    %c0_19 = arith.constant 0 : index
    %c0_20 = arith.constant 0 : index
    %50 = vector.load %arg5[%c0_19, %c0_20] : memref<16x1xf32, #tpu.memory_space<vmem>>, vector<1x1xf32>
    tpu.vector_store %arg5[%c0_19, %c0_20], %49 {strides = array<i32>} : memref<16x1xf32, #tpu.memory_space<vmem>>, vector<1x1xf32>,
    %c1 = arith.constant 1 : index
    %c0_21 = arith.constant 0 : index
    %51 = vector.load %arg5[%c1, %c0_21] : memref<16x1xf32, #tpu.memory_space<vmem>>, vector<1x1xf32>
    %52 = arith.addf %51, %32 : vector<1x1xf32>
    %c1_22 = arith.constant 1 : index
    %c0_23 = arith.constant 0 : index
    %53 = vector.load %arg5[%c1_22, %c0_23] : memref<16x1xf32, #tpu.memory_space<vmem>>, vector<1x1xf32>
    tpu.vector_store %arg5[%c1_22, %c0_23], %52 {strides = array<i32>} : memref<16x1xf32, #tpu.memory_space<vmem>>, vector<1x1xf32>,
    %c2 = arith.constant 2 : index
    %c0_24 = arith.constant 0 : index
    %54 = vector.load %arg5[%c2, %c0_24] : memref<16x1xf32, #tpu.memory_space<vmem>>, vector<2x1xf32>
    %55 = arith.addf %54, %36 : vector<2x1xf32>
    %c2_25 = arith.constant 2 : index
    %c0_26 = arith.constant 0 : index
    %56 = vector.load %arg5[%c2_25, %c0_26] : memref<16x1xf32, #tpu.memory_space<vmem>>, vector<2x1xf32>
    tpu.vector_store %arg5[%c2_25, %c0_26], %55 {strides = array<i32>} : memref<16x1xf32, #tpu.memory_space<vmem>>, vector<2x1xf32>,
    %c4 = arith.constant 4 : index
    %c0_27 = arith.constant 0 : index
    %57 = vector.load %arg5[%c4, %c0_27] : memref<16x1xf32, #tpu.memory_space<vmem>>, vector<2x1xf32>
    %58 = arith.addf %57, %38 : vector<2x1xf32>
    %c4_28 = arith.constant 4 : index
    %c0_29 = arith.constant 0 : index
    %59 = vector.load %arg5[%c4_28, %c0_29] : memref<16x1xf32, #tpu.memory_space<vmem>>, vector<2x1xf32>
    tpu.vector_store %arg5[%c4_28, %c0_29], %58 {strides = array<i32>} : memref<16x1xf32, #tpu.memory_space<vmem>>, vector<2x1xf32>,
    %c6_30 = arith.constant 6 : index
    %c0_31 = arith.constant 0 : index
    %60 = vector.load %arg5[%c6_30, %c0_31] : memref<16x1xf32, #tpu.memory_space<vmem>>, vector<2x1xf32>
    %61 = arith.addf %60, %41 : vector<2x1xf32>
    %c6_32 = arith.constant 6 : index
    %c0_33 = arith.constant 0 : index
    %62 = vector.load %arg5[%c6_32, %c0_33] : memref<16x1xf32, #tpu.memory_space<vmem>>, vector<2x1xf32>
    tpu.vector_store %arg5[%c6_32, %c0_33], %61 {strides = array<i32>} : memref<16x1xf32, #tpu.memory_space<vmem>>, vector<2x1xf32>,
    %c8_34 = arith.constant 8 : index
    %c0_35 = arith.constant 0 : index
    %63 = vector.load %arg5[%c8_34, %c0_35] : memref<16x1xf32, #tpu.memory_space<vmem>>, vector<2x1xf32>
    %64 = arith.addf %63, %44 : vector<2x1xf32>
    %c8_36 = arith.constant 8 : index
    %c0_37 = arith.constant 0 : index
    %65 = vector.load %arg5[%c8_36, %c0_37] : memref<16x1xf32, #tpu.memory_space<vmem>>, vector<2x1xf32>
    tpu.vector_store %arg5[%c8_36, %c0_37], %64 {strides = array<i32>} : memref<16x1xf32, #tpu.memory_space<vmem>>, vector<2x1xf32>,
    %c10 = arith.constant 10 : index
    %c0_38 = arith.constant 0 : index
    %66 = vector.load %arg5[%c10, %c0_38] : memref<16x1xf32, #tpu.memory_space<vmem>>, vector<2x1xf32>
    %67 = arith.addf %66, %47 : vector<2x1xf32>
    %c10_39 = arith.constant 10 : index
    %c0_40 = arith.constant 0 : index
    %68 = vector.load %arg5[%c10_39, %c0_40] : memref<16x1xf32, #tpu.memory_space<vmem>>, vector<2x1xf32>
    tpu.vector_store %arg5[%c10_39, %c0_40], %67 {strides = array<i32>} : memref<16x1xf32, #tpu.memory_space<vmem>>, vector<2x1xf32>,
    %c0_i32_41 = arith.constant 0 : i32
    %69 = arith.cmpi eq, %arg1, %c0_i32_41 : i32
    %70 = arith.extui %69 : i1 to i32
    %c0_i32_42 = arith.constant 0 : i32
    %71 = arith.cmpi ne, %70, %c0_i32_42 : i32
    scf.if %71 {
      %c0_43 = arith.constant 0 : index
      %c0_44 = arith.constant 0 : index
      %72 = vector.load %arg5[%c0_43, %c0_44] : memref<16x1xf32, #tpu.memory_space<vmem>>, vector<16x1xf32>
      %73 = vector.shape_cast %72 : vector<16x1xf32> to vector<1x16x1xf32>
      %c0_45 = arith.constant 0 : index
      %c0_46 = arith.constant 0 : index
      %c0_47 = arith.constant 0 : index
      %74 = vector.load %arg4[%c0_45, %c0_46, %c0_47] : memref<1x16x1xf32, #tpu.memory_space<vmem>>, vector<1x16x1xf32>
      tpu.vector_store %arg4[%c0_45, %c0_46, %c0_47], %73 {strides = array<i32>} : memref<1x16x1xf32, #tpu.memory_space<vmem>>, vector<1x16x1xf32>,
    } else {
    }
    return
  }
  func.func @transform_0(%arg0: i32, %arg1: i32) -> (i32, i32) {
    %c1_i32 = arith.constant 1 : i32
    %0 = arith.muli %arg0, %c1_i32 : i32
    %1 = arith.addi %0, %arg1 : i32
    %c0_i32 = arith.constant 0 : i32
    %c0_i32_0 = arith.constant 0 : i32
    return %c0_i32, %1 : i32, i32
  }
  func.func @transform_1(%arg0: i32, %arg1: i32) -> (i32, i32) {
    %c0_i32 = arith.constant 0 : i32
    %c0_i32_0 = arith.constant 0 : i32
    %c0_i32_1 = arith.constant 0 : i32
    return %c0_i32, %c0_i32_0 : i32, i32
  }
  func.func @transform_2(%arg0: i32, %arg1: i32) -> (i32, i32, i32) {
    %c0_i32 = arith.constant 0 : i32
    %c0_i32_0 = arith.constant 0 : i32
    %c0_i32_1 = arith.constant 0 : i32
    return %arg0, %c0_i32, %c0_i32_0 : i32, i32, i32
  }
}

</mosaic_0001>

<llo_original>
// kernel: multitask_loss.1
$region0: #{multitask_loss.1}
  #allocation0 [shape = 'u32[]', space=smem, size = 0x4, offset = 0x4, fixed_abs, tag = 'smem constant byte address 0x4 - core index']
  #allocation1 [shape = 'u32[144,128]{1,0:T(1,128)}', space=vmem, size = 0x12000, scoped, tag = 'internal scratch']
  #allocation2 [shape = 'f32[16,1]{1,0:T(8,128)}', space=vmem, size = 0x2000, scoped, tag = 'scratch operand']
  %s0 = inlined_call_operand.vmem [shape: f32[16,256], index: 0, kind: input, shape index: {}]
  %s1 = inlined_call_operand.vmem [shape: f32[6,1], index: 1, kind: input, shape index: {}]
  %s2 = inlined_call_operand.vmem [shape: f32[2,16,1], index: 2, kind: output, shape index: {}]
  %s3 = sld [smem:[#allocation0]]
  $region87: #{multitask_loss.1} parent=0
    _
  %s5 = ssub.s32 1, %s3
  %s6 = scalar_select 0, %s5, %s3
  $region1: #{multitask_loss.1} parent=0
    #allocation3 [shape = 'u8[16384]{0}', space=vmem, size = 0x4000, scoped, tag = 'input window, operand 0']
    loop: start=0, step=1, limit=4
    $region2: #{multitask_loss.1} parent=1 // loop_pre_header
      _
    $region3: #{multitask_loss.1} parent=1 // loop_header
      %s8 = sphi 0, %s12
      %p9 = scmp.ge.s32.totalorder %s8, 4
      %s15 = sphi 0, %s27
      %s16 = sphi 0, %s23
      %s17 = sphi 0, %s15
      %s18 = sphi 0, %s16
      %s19 = sphi 0, %s17
      %s20 = sphi 0, %s18
      %s32 = sphi 0, %s34
      %s35 = sphi 0, %s32
      %s36 = sphi 0, %s35
      %s52 = sphi 0, %s36
      %s56 = sphi 0, %s56
      %s58 = sphi 0, %s56
      %s59 = sphi 0, %s58
      %s73 = sphi 0, %s59
      %s79 = sphi 0, %s81
      %s82 = sphi 0, %s79
      %s83 = sphi 0, %s82
      %s99 = sphi 0, %s83
    $region4: #{multitask_loss.1} parent=1 // loop_header_branch
      %11 = sbr.rel (%p9) target = $region8
    $region5: #{multitask_loss.1} parent=1 // loop_body
      %s13 = ssub.s32 %s8, 1
      %s14 = ssub.s32 %s8, 2
      %s21 = sadd.s32 1, %s16
      %p22 = scmp.ge.s32.totalorder %s21, 1
      %s23 = scalar_select %p22, 0, %s21
      %s24 = sadd.s32 1, %s15
      %s25 = scalar_select %p22, %s24, %s15
      %p26 = scmp.ge.s32.totalorder %s25, 2
      %s27 = scalar_select %p26, 0, %s25
      %s28 = sadd.s32 %s15, %s16
      %s29 = sadd.s32 %s27, %s23
      %s30 = ssub.s32 %s28, %s29
      %p31 = scmp.eq.s32.totalorder %s30, 0
      %s33 = sadd.s32 %s32, 1
      %s34 = scalar_select %p31, %s32, %s33
      %p37 = pneg %p31
      %p38 = scmp.eq.s32.totalorder %s8, 1
      %p39 = por %p37, %p38
      %p40 = scmp.ne.s32.totalorder %s32, %s35
      %p41 = scmp.eq.s32.totalorder %s8, 0
      %p42 = por %p40, %p41
      %p43 = scmp.ne.s32.totalorder %s32, %s35
      %p44 = scmp.eq.s32.totalorder %s13, 1
      %p45 = por %p43, %p44
      %p46 = scmp.ne.s32.totalorder %s35, %s36
      %p47 = scmp.eq.s32.totalorder %s13, 0
      %p48 = por %p46, %p47
      %p49 = scmp.ne.s32.totalorder %s35, %s36
      %p50 = scmp.eq.s32.totalorder %s14, 1
      %p51 = por %p49, %p50
      %p53 = scmp.ne.s32.totalorder %s36, %s52
      %p54 = scmp.eq.s32.totalorder %s14, 0
      %p55 = por %p53, %p54
      %s57 = sadd.s32 %s56, 1
      %p60 = scmp.eq.s32.totalorder %s8, 1
      %p61 = scmp.ne.s32.totalorder %s56, %s58
      %p62 = scmp.eq.s32.totalorder %s8, 0
      %p63 = por %p61, %p62
      %p64 = scmp.ne.s32.totalorder %s56, %s58
      %p65 = scmp.eq.s32.totalorder %s13, 1
      %p66 = por %p64, %p65
      %p67 = scmp.ne.s32.totalorder %s58, %s59
      %p68 = scmp.eq.s32.totalorder %s13, 0
      %p69 = por %p67, %p68
      %p70 = scmp.ne.s32.totalorder %s58, %s59
      %p71 = scmp.eq.s32.totalorder %s14, 1
      %p72 = por %p70, %p71
      %p74 = scmp.ne.s32.totalorder %s59, %s73
      %p75 = scmp.eq.s32.totalorder %s14, 0
      %p76 = por %p74, %p75
      %s77 = ssub.s32 %s15, %s27
      %p78 = scmp.eq.s32.totalorder %s77, 0
      %s80 = sadd.s32 %s79, 1
      %s81 = scalar_select %p78, %s79, %s80
      %p84 = pneg %p78
      %p85 = scmp.eq.s32.totalorder %s8, 1
      %p86 = por %p84, %p85
      %p87 = scmp.ne.s32.totalorder %s79, %s82
      %p88 = scmp.eq.s32.totalorder %s8, 0
      %p89 = por %p87, %p88
      %p90 = scmp.ne.s32.totalorder %s79, %s82
      %p91 = scmp.eq.s32.totalorder %s13, 1
      %p92 = por %p90, %p91
      %p93 = scmp.ne.s32.totalorder %s82, %s83
      %p94 = scmp.eq.s32.totalorder %s13, 0
      %p95 = por %p93, %p94
      %p96 = scmp.ne.s32.totalorder %s82, %s83
      %p97 = scmp.eq.s32.totalorder %s14, 1
      %p98 = por %p96, %p97
      %p100 = scmp.ne.s32.totalorder %s83, %s99
      %p101 = scmp.eq.s32.totalorder %s14, 0
      %p102 = por %p100, %p101
      %p103 = scmp.le.s32.totalorder 1, %s8
      %p104 = scmp.lt.s32.totalorder %s8, 3
      %p105 = pnand %p103, %p104
      %p106 = pneg %p105
      // Predicated region
      $region9: #{multitask_loss.1} parent=5 // pred_check
        _
      $region10: #{multitask_loss.1} parent=5 // pred_check_branch
        %108 = sbr.rel (%p105) target = $region12
      $region11: #{multitask_loss.1} parent=5 // pred_region
        %s109 = ssub.s32 %s8, 1
        // Predicated region
        $region13: #{multitask_loss.1} parent=11 // pred_check
          %p110 = pneg %p69
        $region14: #{multitask_loss.1} parent=11 // pred_check_branch
          %112 = sbr.rel (%p110) target = $region16
        $region15: #{multitask_loss.1} parent=11 // pred_region
          _
        $region16: #{multitask_loss.1} parent=11 // pred_fallthru
          _
      $region12: #{multitask_loss.1} parent=5 // pred_fallthru
        _
      %p113 = scmp.lt.s32.totalorder %s8, 2
      // Predicated region
      $region17: #{multitask_loss.1} parent=5 // pred_check
        %p114 = pneg %p113
      $region18: #{multitask_loss.1} parent=5 // pred_check_branch
        %116 = sbr.rel (%p114) target = $region20
      $region19: #{multitask_loss.1} parent=5 // pred_region
        // Predicated region
        $region21: #{multitask_loss.1} parent=19 // pred_check
          %p117 = pneg %p42
        $region22: #{multitask_loss.1} parent=19 // pred_check_branch
          %119 = sbr.rel (%p117) target = $region24
        $region23: #{multitask_loss.1} parent=19 // pred_region
          %s120 = sand.u32 %s32, 1
          %s121 = sand.u32 %s32, 1
          %s122 = smul.addr %s121, 16
          %s123 = scalar_lea.vmem [#allocation3], %s122
          %s124 = sadd.s32 %s15, %s16
          %s125 = smul.addr %s124, 8
          %s126 = scalar_lea.vmem %s0, %s125
          // Predicated region
          $region25: #{multitask_loss.1} parent=23 // pred_check
            _
          $region26: #{multitask_loss.1} parent=23 // pred_check_branch
            %128 = sbr.rel (0) target = $region28
          $region27: #{multitask_loss.1} parent=23 // pred_region
            // Predicated region
            $region29: #{multitask_loss.1} parent=27 // pred_check
              _
            $region30: #{multitask_loss.1} parent=27 // pred_check_branch
              %130 = sbr.rel (0) target = $region32
            $region31: #{multitask_loss.1} parent=27 // pred_region
              // Predicated region
              $region44: #{multitask_loss.1} parent=31 // pred_check
                _
              $region45: #{multitask_loss.1} parent=31 // pred_check_branch
                %148 = sbr.rel (0) target = $region47
              $region46: #{multitask_loss.1} parent=31 // pred_region
                loop: start=0, step=1, limit=1
                $region48: #{multitask_loss.1} parent=46 // loop_pre_header
                  _
                $region49: #{multitask_loss.1} parent=46 // loop_header
                  %s150 = sphi 0, %s154
                  %p151 = scmp.ge.s32.totalorder %s150, 1
                  %s155 = sphi %s126, %s126
                  %s156 = sphi %s123, %s123
                $region50: #{multitask_loss.1} parent=46 // loop_header_branch
                  %153 = sbr.rel (%p151) target = $region54
                $region51: #{multitask_loss.1} parent=46 // loop_body
                  %v157 = vld [vmem:[%s155] sm:$0xff]
                  %158 = vst [vmem:[%s156] sm:$0xff] %v157
                  %v159 = vld [vmem:[%s155 + $0x10] sm:$0xff]
                  %160 = vst [vmem:[%s156 + $0x8] sm:$0xff] %v159
                $region52: #{multitask_loss.1} parent=46 // loop_footer
                  %s154 = sadd.s32 1, %s150
                $region53: #{multitask_loss.1} parent=46 // loop_footer_branch
                  %149 = sbr.rel target = $region49
                $region54: #{multitask_loss.1} parent=46 // loop_exit
                  _
              $region47: #{multitask_loss.1} parent=31 // pred_fallthru
                _
              // Predicated region
              $region55: #{multitask_loss.1} parent=31 // pred_check
                _
              $region56: #{multitask_loss.1} parent=31 // pred_check_branch
                %162 = sbr.rel target = $region58
              $region57: #{multitask_loss.1} parent=31 // pred_region
                _
              $region58: #{multitask_loss.1} parent=31 // pred_fallthru
                _
            $region32: #{multitask_loss.1} parent=27 // pred_fallthru
              _
            // Predicated region
            $region33: #{multitask_loss.1} parent=27 // pred_check
              _
            $region34: #{multitask_loss.1} parent=27 // pred_check_branch
              %132 = sbr.rel target = $region36
            $region35: #{multitask_loss.1} parent=27 // pred_region
              %s134 = ssub.s32 256, 1
              loop: start=0, step=1, limit=1
              $region37: #{multitask_loss.1} parent=35 // loop_pre_header
                _
              $region38: #{multitask_loss.1} parent=35 // loop_header
                %s136 = sphi 0, %s140
                %p137 = scmp.ge.s32.totalorder %s136, 1
                %s141 = sphi %s126, %s126
                %s142 = sphi %s123, %s123
              $region39: #{multitask_loss.1} parent=35 // loop_header_branch
                %139 = sbr.rel (%p137) target = $region43
              $region40: #{multitask_loss.1} parent=35 // loop_body
                %v143 = vld [vmem:[%s141] sm:%s134]
                %144 = vst [vmem:[%s142] sm:%s134] %v143
                %v145 = vld [vmem:[%s141 + $0x10] sm:%s134]
                %146 = vst [vmem:[%s142 + $0x8] sm:%s134] %v145
              $region41: #{multitask_loss.1} parent=35 // loop_footer
                %s140 = sadd.s32 1, %s136
              $region42: #{multitask_loss.1} parent=35 // loop_footer_branch
                %135 = sbr.rel target = $region38
              $region43: #{multitask_loss.1} parent=35 // loop_exit
                _
            $region36: #{multitask_loss.1} parent=27 // pred_fallthru
              _
          $region28: #{multitask_loss.1} parent=23 // pred_fallthru
            _
          %163 = vnop
        $region24: #{multitask_loss.1} parent=19 // pred_fallthru
          _
      $region20: #{multitask_loss.1} parent=5 // pred_fallthru
        _
      %p164 = scmp.le.s32.totalorder 1, %s8
      %p165 = scmp.lt.s32.totalorder %s8, 3
      %p166 = pnand %p164, %p165
      %p167 = pneg %p166
      // Predicated region
      $region59: #{multitask_loss.1} parent=5 // pred_check
        _
      $region60: #{multitask_loss.1} parent=5 // pred_check_branch
        %169 = sbr.rel (%p166) target = $region62
      $region61: #{multitask_loss.1} parent=5 // pred_region
        %s170 = ssub.s32 %s8, 1
        %s171 = sand.u32 %s35, 1
        %s172 = sand.u32 %s35, 1
        %s173 = smul.addr %s172, 16
        %s174 = scalar_lea.vmem [#allocation3], %s173
        // Predicated region
        $region63: #{multitask_loss.1} parent=61 // pred_check
          %p175 = pneg %p48
        $region64: #{multitask_loss.1} parent=61 // pred_check_branch
          %177 = sbr.rel (%p175) target = $region66
        $region65: #{multitask_loss.1} parent=61 // pred_region
          _
        $region66: #{multitask_loss.1} parent=61 // pred_fallthru
          _
        %s178 = sand.u32 %s35, 1
        %s179 = sand.u32 %s35, 1
        %s180 = smul.addr %s179, 16
        %s181 = scalar_lea.vmem [#allocation3], %s180
        %p182 = pneg %p48
        %p183 = pneg %p45
        %p184 = pneg %p69
        %p185 = pneg %p66
        %p186 = pneg %p95
        %p187 = pneg %p92
        %p188 = scmp.lt.s32.totalorder %s17, 1
        %s189 = scalar_select %p188, %s17, 1
        %s190 = smul.addr %s189, 2
        %s191 = smul.addr %s190, 8
        %s192 = scalar_lea.vmem %s2, %s191
        %s193 = sadd.s32 %s17, %s18
        %p194 = scmp.lt.s32.totalorder %s17, 1
        %s195 = scalar_select %p194, %s17, 1
        %s196 = smul.addr %s195, 2
        %s197 = smul.addr %s196, 8
        %s198 = scalar_lea.vmem %s2, %s197
        %p199 = scmp.eq.s32.totalorder %s18, 0
        // Predicated region
        $region67: #{multitask_loss.1} parent=61 // pred_check
          %p200 = pneg %p199
        $region68: #{multitask_loss.1} parent=61 // pred_check_branch
          %202 = sbr.rel (%p200) target = $region70
        $region69: #{multitask_loss.1} parent=61 // pred_region
          %vm203 = vcmask 7168
          %204 = vst.msk [vmem:[#allocation2] sm:$0xff] %vm203, 0.0
          %205 = vst.msk [vmem:[#allocation2 + $0x8] sm:$0xff] %vm203, 0.0
        $region70: #{multitask_loss.1} parent=61 // pred_fallthru
          _
        %v206 = vld [vmem:[%s174] sm:$0x3f]
        %vm207 = vcmask 1045504
        %v208 = vsel %vm207, %v206, -inf
        %v209 = vrot.slane %v208, 4
        %v210 = vmax.f32 %v208, %v209
        %v211 = vrot.slane %v210, 2
        %v212 = vmax.f32 %v210, %v211
        %v213 = vrot.slane %v212, 1
        %v214 = vmax.f32 %v212, %v213
        %v215 = vsub.f32 %v206, %v214
        %v216 = vmul.f32 %v215, 1.442695
        %v217 = vpow.pop %v216
        %v218 = vsel %vm207, %v217, 0.0
        %v219 = vrot.slane %v218, 4
        %v220 = vadd.f32 %v218, %v219
        %v221 = vrot.slane %v220, 2
        %v222 = vadd.f32 %v220, %v221
        %v223 = vrot.slane %v222, 1
        %v224 = vadd.f32 %v222, %v223
        %v225 = vlog2.pop %v224
        %v226 = vmul.f32 %v225, 0.6931472
        %v227 = vld [vmem:[%s174 + $0x8] sm:$0x1]
        %v228 = vlaneseq
        %v229 = vshrl.u32 %v228, 7
        %v230 = vcvt.s32.f32 %v229
        %v231 = vlaneseq
        %v232 = vshrl.u32 %v231, 7
        %v233 = vsub.s32 0, %v232
        %v234 = vrot.slane %v227, %v233
        %vm235 = vcmp.eq.f32.partialorder %v230, %v234
        %v236 = vsel %vm235, 1, 0
        %v237 = vcvt.s32.f32 %v236
        %v238 = vmul.f32 %v237, %v215
        %v239 = vsel %vm207, %v238, 0.0
        %v240 = vrot.slane %v239, 4
        %v241 = vadd.f32 %v239, %v240
        %v242 = vrot.slane %v241, 2
        %v243 = vadd.f32 %v241, %v242
        %v244 = vrot.slane %v243, 1
        %v245 = vadd.f32 %v243, %v244
        %v246 = vld [vmem:[%s1] sm:$0x3f]
        %248 = vset.pattern.permute.xlu0 0
        %249 = vperm.xlu0 %248, %v246
        %v250 = vpop.permute.xlu0 %249
        %v252 = vmul.f32 %v237, %v250
        %v253 = vsel %vm207, %v252, 0.0
        %v254 = vrot.slane %v253, 4
        %v255 = vadd.f32 %v253, %v254
        %v256 = vrot.slane %v255, 2
        %v257 = vadd.f32 %v255, %v256
        %v258 = vrot.slane %v257, 1
        %v259 = vadd.f32 %v257, %v258
        %v260 = vsub.f32 %v226, %v245
        %v261 = vmul.f32 %v259, %v260
        %262 = vadd.xlane.f32.xlu0 %v261
        %v263 = vpop.xlane.xlu0 %262
        %264 = vadd.xlane.f32.xlu0 %v259
        %v265 = vpop.xlane.xlu0 %264
        %v266 = vld [vmem:[%s174 + $0x6] sm:$0x3]
        %v267 = vld [vmem:[%s174 + $0xe] sm:$0x3]
        %vm268 = vcmask 1041408
        %v269 = vsel %vm268, %v266, 0.0
        %270 = vadd.xlane.f32.xlu0 %v269
        %v271 = vpop.xlane.xlu0 %270
        %v272 = vsel %vm268, %v267, 0.0
        %273 = vadd.xlane.f32.xlu0 %v272
        %v274 = vpop.xlane.xlu0 %273
        %v275 = vmul.f32 %v266, %v266
        %v276 = vsel %vm268, %v275, 0.0
        %277 = vadd.xlane.f32.xlu0 %v276
        %v278 = vpop.xlane.xlu0 %277
        %v279 = vmul.f32 %v267, %v267
        %v280 = vsel %vm268, %v279, 0.0
        %281 = vadd.xlane.f32.xlu0 %v280
        %v282 = vpop.xlane.xlu0 %281
        %v283 = vmul.f32 %v266, %v267
        %v284 = vsel %vm268, %v283, 0.0
        %285 = vadd.xlane.f32.xlu0 %v284
        %v286 = vpop.xlane.xlu0 %285
        %v287 = vld [vmem:[#allocation2] sm:$0x1]
        %v288 = vadd.f32 %v287, %v263
        %vm289 = vcmask 0
        %290 = vst.msk [vmem:[#allocation2] sm:$0x1] %vm289, %v288
        %v291 = vld [vmem:[#allocation2 + $0x1] sm:$0x1]
        %v292 = vadd.f32 %v291, %v265
        %293 = vst.msk [vmem:[#allocation2 + $0x1] sm:$0x1] %vm289, %v292
        %v294 = vld [vmem:[#allocation2 + $0x2] sm:$0x3]
        %v295 = vadd.f32 %v294, %v271
        %vm296 = vcmask 1024
        %297 = vst.msk [vmem:[#allocation2 + $0x2] sm:$0x3] %vm296, %v295
        %v298 = vld [vmem:[#allocation2 + $0x4] sm:$0x3]
        %v299 = vadd.f32 %v298, %v274
        %300 = vst.msk [vmem:[#allocation2 + $0x4] sm:$0x3] %vm296, %v299
        %v301 = vld [vmem:[#allocation2 + $0x6] sm:$0x3]
        %v302 = vadd.f32 %v301, %v278
        %303 = vst.msk [vmem:[#allocation2 + $0x6] sm:$0x3] %vm296, %v302
        %v304 = vld [vmem:[#allocation2 + $0x8] sm:$0x3]
        %v305 = vadd.f32 %v304, %v282
        %306 = vst.msk [vmem:[#allocation2 + $0x8] sm:$0x3] %vm296, %v305
        %v307 = vld [vmem:[#allocation2 + $0xa] sm:$0x3]
        %v308 = vadd.f32 %v307, %v286
        %309 = vst.msk [vmem:[#allocation2 + $0xa] sm:$0x3] %vm296, %v308
        // Predicated region
        $region71: #{multitask_loss.1} parent=61 // pred_check
          %p310 = pneg %p199
        $region72: #{multitask_loss.1} parent=61 // pred_check_branch
          %312 = sbr.rel (%p310) target = $region74
        $region73: #{multitask_loss.1} parent=61 // pred_region
          %v313 = vld [vmem:[#allocation2] sm:$0xff]
          %v314 = vld [vmem:[#allocation2 + $0x8] sm:$0xff]
          %vm315 = vcmask 7168
          %316 = vst.msk [vmem:[%s198] sm:$0xff] %vm315, %v313
          %317 = vst.msk [vmem:[%s198 + $0x8] sm:$0xff] %vm315, %v314
        $region74: #{multitask_loss.1} parent=61 // pred_fallthru
          _
        %p318 = scmp.lt.s32.totalorder %s17, 1
        %s319 = scalar_select %p318, %s17, 1
        %s320 = smul.addr %s319, 2
        %s321 = smul.addr %s320, 8
        %s322 = scalar_lea.vmem %s2, %s321
        // Predicated region
        $region75: #{multitask_loss.1} parent=61 // pred_check
          %p323 = pneg %p92
        $region76: #{multitask_loss.1} parent=61 // pred_check_branch
          %325 = sbr.rel (%p323) target = $region78
        $region77: #{multitask_loss.1} parent=61 // pred_region
          _
        $region78: #{multitask_loss.1} parent=61 // pred_fallthru
          _
      $region62: #{multitask_loss.1} parent=5 // pred_fallthru
        _
      %p326 = scmp.le.s32.totalorder 2, %s8
      // Predicated region
      $region79: #{multitask_loss.1} parent=5 // pred_check
        %p327 = pneg %p326
      $region80: #{multitask_loss.1} parent=5 // pred_check_branch
        %329 = sbr.rel (%p327) target = $region82
      $region81: #{multitask_loss.1} parent=5 // pred_region
        %s330 = ssub.s32 %s8, 2
        // Predicated region
        $region83: #{multitask_loss.1} parent=81 // pred_check
          %p331 = pneg %p98
        $region84: #{multitask_loss.1} parent=81 // pred_check_branch
          %333 = sbr.rel (%p331) target = $region86
        $region85: #{multitask_loss.1} parent=81 // pred_region
          %p334 = scmp.lt.s32.totalorder %s19, 1
          %s335 = scalar_select %p334, %s19, 1
          %s336 = smul.addr %s335, 2
          %s337 = smul.addr %s336, 8
          %s338 = scalar_lea.vmem %s2, %s337
        $region86: #{multitask_loss.1} parent=81 // pred_fallthru
          _
      $region82: #{multitask_loss.1} parent=5 // pred_fallthru
        _
    $region6: #{multitask_loss.1} parent=1 // loop_footer
      %s12 = sadd.s32 1, %s8
    $region7: #{multitask_loss.1} parent=1 // loop_footer_branch
      %7 = sbr.rel target = $region3
    $region8: #{multitask_loss.1} parent=1 // loop_exit
      _

</llo_original>
